<compile_context>
chip_gen: v6e
topology: v6e:2x2x1
jax: 0.10.0
libtpu: 0.0.40
codegen_flags: <defaults>
</compile_context>

<pallas_src>
import jax
import jax.numpy as jnp
from jax.experimental import pallas as pl
from jax.experimental.pallas import tpu as pltpu


def deepset_kernel(x_ref,
                   w1_ref, b1_ref, w2_ref, b2_ref, w3_ref, b3_ref,
                   w4_ref, b4_ref, w5_ref, b5_ref, w6_ref, b6_ref,
                   out_ref, pooled_ref):
    b = pl.program_id(0)
    nb = pl.num_programs(0)
    S = x_ref.shape[0]
    inv_s = 1.0 / S  # compile-time constant (replaces a vector divide)

    @pl.when(b == 0)
    def _():
        pooled_ref[...] = jnp.zeros_like(pooled_ref)

    # ---- encoder layers 1 & 2 on this batch element's (S, HP) tile ----
    x = x_ref[...]                                               # (S, HP) f32
    h = jnp.dot(x.astype(jnp.bfloat16), w1_ref[...],
                preferred_element_type=jnp.float32) + b1_ref[...]
    h = jnp.maximum(h, 0.0)
    h = jnp.dot(h.astype(jnp.bfloat16), w2_ref[...],
                preferred_element_type=jnp.float32) + b2_ref[...]
    h = jnp.maximum(h, 0.0)

    # ---- pool over the set dim BEFORE encoder layer 3 (linearity of the mean) ----
    pooled_ref[pl.ds(b, 1), :] = jnp.sum(h, axis=0, keepdims=True) * inv_s

    # ---- last grid step: encoder layer 3 + decoder on the pooled (BP, HP) block ----
    @pl.when(b == nb - 1)
    def _():
        p = pooled_ref[...]                                      # (BP, HP) f32, padded rows = 0
        t = jnp.dot(p.astype(jnp.bfloat16), w3_ref[...],
                    preferred_element_type=jnp.float32) + b3_ref[...]
        d = jnp.dot(t.astype(jnp.bfloat16), w4_ref[...],
                    preferred_element_type=jnp.float32) + b4_ref[...]
        d = jnp.maximum(d, 0.0)
        d = jnp.dot(d.astype(jnp.bfloat16), w5_ref[...],
                    preferred_element_type=jnp.float32) + b5_ref[...]
        d = jnp.maximum(d, 0.0)
        d = jnp.dot(d.astype(jnp.bfloat16), w6_ref[...],
                    preferred_element_type=jnp.float32) + b6_ref[...]
        out_ref[...] = d.astype(out_ref.dtype)


def deepset_forward(x, params):
    """x: (B, S, H) float32; params: list of (W, b) for 6 Linear(H, H) layers,
    with W stored as (H_in, H_out) so the kernel computes x @ W + b."""
    B, S, H = x.shape
    HP = ((H + 127) // 128) * 128          # lane-dense hidden dim (64 -> 128)
    BP = max(((B + 7) // 8) * 8, 8)        # sublane-dense batch dim for the decoder/output

    # Zero-padding is exact for the first H output channels.
    x_p = jnp.zeros((B, S, HP), jnp.float32).at[:, :, :H].set(x.astype(jnp.float32))

    flat = []
    for (w, bias) in params:
        w_p = jnp.zeros((HP, HP), jnp.float32).at[:H, :H].set(w)
        b_p = jnp.zeros((1, HP), jnp.float32).at[0, :H].set(bias)
        flat.append(w_p.astype(jnp.bfloat16))   # bf16 weights: full-rate MXU + half HBM traffic
        flat.append(b_p)                        # biases stay f32 (elementwise math stays f32)

    x_spec = pl.BlockSpec((None, S, HP), lambda i: (i, 0, 0))     # one clean (S, HP) tile per step
    w_spec = pl.BlockSpec((HP, HP), lambda i: (0, 0))             # VMEM-resident weights
    b_spec = pl.BlockSpec((1, HP), lambda i: (0, 0))
    in_specs = [x_spec] + [w_spec, b_spec] * 6

    out = pl.pallas_call(
        deepset_kernel,
        out_shape=jax.ShapeDtypeStruct((BP, HP), jnp.float32),
        grid=(B,),
        in_specs=in_specs,
        out_specs=pl.BlockSpec((BP, HP), lambda i: (0, 0)),       # resident, written on last step
        scratch_shapes=[pltpu.VMEM((BP, HP), jnp.float32)],       # pooled accumulator
        compiler_params=pltpu.CompilerParams(
            # Grid axis carries the pooled scratch + resident output block -> "arbitrary".
            dimension_semantics=("arbitrary",),
            vmem_limit_bytes=32 * 1024 * 1024,
        ),
    )(x_p, *flat)

    return out[:B, :H]


def deepset_reference(x, params):
    """Pure-JAX f32 reference mirroring the PyTorch forward."""
    (w1, b1), (w2, b2), (w3, b3), (w4, b4), (w5, b5), (w6, b6) = params
    h = jnp.maximum(x @ w1 + b1, 0.0)
    h = jnp.maximum(h @ w2 + b2, 0.0)
    h = h @ w3 + b3
    p = h.mean(axis=-2)
    d = jnp.maximum(p @ w4 + b4, 0.0)
    d = jnp.maximum(d @ w5 + b5, 0.0)
    d = d @ w6 + b6
    return d


def init_params(key, hidden_dim):
    """Deterministic synthetic init for the 6 Linear(hidden, hidden) layers."""
    params = []
    scale = 1.0 / jnp.sqrt(hidden_dim)
    for _ in range(6):
        key, kw, kb = jax.random.split(key, 3)
        w = jax.random.uniform(kw, (hidden_dim, hidden_dim),
                               minval=-scale, maxval=scale, dtype=jnp.float32)
        b = jax.random.uniform(kb, (hidden_dim,),
                               minval=-scale, maxval=scale, dtype=jnp.float32)
        params.append((w, b))
    return params


if __name__ == "__main__":
    B, S, H = 2, 8, 64  # batch=2, set size=8, hidden_dim=64 (module default)
    key = jax.random.PRNGKey(0)
    kx, kp = jax.random.split(key)
    x = jax.random.normal(kx, (B, S, H), dtype=jnp.float32)
    params = init_params(kp, H)

    out = deepset_forward(x, params)
    out = jax.block_until_ready(out)

    ref = deepset_reference(x, params)
    assert out.shape == (B, H)
    # bf16 matmul inputs + pool-before-layer-3 reassociation -> widened tolerance.
    assert jnp.allclose(out, ref, atol=3e-2, rtol=3e-2), "mismatch vs reference"

    print("KERNEL_OK")
</pallas_src>

<mosaic_0001>
module attributes {stable_mosaic.version = 11 : i64} {
  func.func @deepset_kernel(%arg0: i32, %arg1: memref<1x8x128xf32, #tpu.memory_space<vmem>>, %arg2: memref<128x128xbf16, #tpu.memory_space<vmem>>, %arg3: memref<1x128xf32, #tpu.memory_space<vmem>>, %arg4: memref<128x128xbf16, #tpu.memory_space<vmem>>, %arg5: memref<1x128xf32, #tpu.memory_space<vmem>>, %arg6: memref<128x128xbf16, #tpu.memory_space<vmem>>, %arg7: memref<1x128xf32, #tpu.memory_space<vmem>>, %arg8: memref<128x128xbf16, #tpu.memory_space<vmem>>, %arg9: memref<1x128xf32, #tpu.memory_space<vmem>>, %arg10: memref<128x128xbf16, #tpu.memory_space<vmem>>, %arg11: memref<1x128xf32, #tpu.memory_space<vmem>>, %arg12: memref<128x128xbf16, #tpu.memory_space<vmem>>, %arg13: memref<1x128xf32, #tpu.memory_space<vmem>>, %arg14: memref<8x128xf32, #tpu.memory_space<vmem>>, %arg15: memref<8x128xf32, #tpu.memory_space<vmem>>) attributes {dimension_semantics = [#tpu.dimension_semantics<arbitrary>], iteration_bounds = array<i64: 2>, scalar_prefetch = 0 : i64, scratch_operands = 1 : i64, tpu.core_type = #tpu.core_type<tc>, window_params = [{transform_indices = @transform_0, window_bounds = array<i64: 1, 8, 128>}, {pipeline_mode = #tpu.pipeline_mode<synchronous>, transform_indices = @transform_1, window_bounds = array<i64: 128, 128>}, {pipeline_mode = #tpu.pipeline_mode<synchronous>, transform_indices = @transform_2, window_bounds = array<i64: 1, 128>}, {pipeline_mode = #tpu.pipeline_mode<synchronous>, transform_indices = @transform_3, window_bounds = array<i64: 128, 128>}, {pipeline_mode = #tpu.pipeline_mode<synchronous>, transform_indices = @transform_4, window_bounds = array<i64: 1, 128>}, {pipeline_mode = #tpu.pipeline_mode<synchronous>, transform_indices = @transform_5, window_bounds = array<i64: 128, 128>}, {pipeline_mode = #tpu.pipeline_mode<synchronous>, transform_indices = @transform_6, window_bounds = array<i64: 1, 128>}, {pipeline_mode = #tpu.pipeline_mode<synchronous>, transform_indices = @transform_7, window_bounds = array<i64: 128, 128>}, {pipeline_mode = #tpu.pipeline_mode<synchronous>, transform_indices = @transform_8, window_bounds = array<i64: 1, 128>}, {pipeline_mode = #tpu.pipeline_mode<synchronous>, transform_indices = @transform_9, window_bounds = array<i64: 128, 128>}, {pipeline_mode = #tpu.pipeline_mode<synchronous>, transform_indices = @transform_10, window_bounds = array<i64: 1, 128>}, {pipeline_mode = #tpu.pipeline_mode<synchronous>, transform_indices = @transform_11, window_bounds = array<i64: 128, 128>}, {pipeline_mode = #tpu.pipeline_mode<synchronous>, transform_indices = @transform_12, window_bounds = array<i64: 1, 128>}, {pipeline_mode = #tpu.pipeline_mode<synchronous>, transform_indices = @transform_13, window_bounds = array<i64: 8, 128>}]} {
    %c0_i32 = arith.constant 0 : i32
    %0 = arith.cmpi eq, %arg0, %c0_i32 : i32
    %1 = arith.extui %0 : i1 to i32
    %c0_i32_0 = arith.constant 0 : i32
    %2 = arith.cmpi ne, %1, %c0_i32_0 : i32
    scf.if %2 {
      %cst_18 = arith.constant 0.000000e+00 : f32
      %30 = vector.broadcast %cst_18 : f32 to vector<8x128xf32>
      %c0_19 = arith.constant 0 : index
      %c0_20 = arith.constant 0 : index
      %31 = vector.load %arg15[%c0_19, %c0_20] : memref<8x128xf32, #tpu.memory_space<vmem>>, vector<8x128xf32>
      tpu.vector_store %arg15[%c0_19, %c0_20], %30 {strides = array<i32>} : memref<8x128xf32, #tpu.memory_space<vmem>>, vector<8x128xf32>,
    } else {
    }
    %c0 = arith.constant 0 : index
    %c0_1 = arith.constant 0 : index
    %c0_2 = arith.constant 0 : index
    %3 = vector.load %arg1[%c0, %c0_1, %c0_2] : memref<1x8x128xf32, #tpu.memory_space<vmem>>, vector<1x8x128xf32>
    %4 = vector.shape_cast %3 : vector<1x8x128xf32> to vector<8x128xf32>
    %5 = arith.truncf %4 : vector<8x128xf32> to vector<8x128xbf16>
    %c0_3 = arith.constant 0 : index
    %c0_4 = arith.constant 0 : index
    %6 = vector.load %arg2[%c0_3, %c0_4] : memref<128x128xbf16, #tpu.memory_space<vmem>>, vector<128x128xbf16>
    %cst = arith.constant dense<0.000000e+00> : vector<8x128xf32>
    %7 = tpu.matmul %5, %6, %cst {dimension_numbers = #tpu.dot_dimension_numbers<[1], [0], [0], [1], [0, 0, 1, 1], [], []>} : vector<8x128xbf16>, vector<128x128xbf16>, vector<8x128xf32> -> vector<8x128xf32>
    %c0_5 = arith.constant 0 : index
    %c0_6 = arith.constant 0 : index
    %8 = vector.load %arg3[%c0_5, %c0_6] : memref<1x128xf32, #tpu.memory_space<vmem>>, vector<1x128xf32>
    %9 = vector.broadcast %8 : vector<1x128xf32> to vector<8x128xf32>
    %10 = arith.addf %7, %9 : vector<8x128xf32>
    %cst_7 = arith.constant 0.000000e+00 : f32
    %11 = vector.broadcast %cst_7 : f32 to vector<8x128xf32>
    %12 = arith.maximumf %10, %11 : vector<8x128xf32>
    %13 = arith.truncf %12 : vector<8x128xf32> to vector<8x128xbf16>
    %c0_8 = arith.constant 0 : index
    %c0_9 = arith.constant 0 : index
    %14 = vector.load %arg4[%c0_8, %c0_9] : memref<128x128xbf16, #tpu.memory_space<vmem>>, vector<128x128xbf16>
    %cst_10 = arith.constant dense<0.000000e+00> : vector<8x128xf32>
    %15 = tpu.matmul %13, %14, %cst_10 {dimension_numbers = #tpu.dot_dimension_numbers<[1], [0], [0], [1], [0, 0, 1, 1], [], []>} : vector<8x128xbf16>, vector<128x128xbf16>, vector<8x128xf32> -> vector<8x128xf32>
    %c0_11 = arith.constant 0 : index
    %c0_12 = arith.constant 0 : index
    %16 = vector.load %arg5[%c0_11, %c0_12] : memref<1x128xf32, #tpu.memory_space<vmem>>, vector<1x128xf32>
    %17 = vector.broadcast %16 : vector<1x128xf32> to vector<8x128xf32>
    %18 = arith.addf %15, %17 : vector<8x128xf32>
    %cst_13 = arith.constant 0.000000e+00 : f32
    %19 = vector.broadcast %cst_13 : f32 to vector<8x128xf32>
    %20 = arith.maximumf %18, %19 : vector<8x128xf32>
    %cst_14 = arith.constant dense<0.000000e+00> : vector<128xf32>
    %21 = vector.multi_reduction <add>, %20, %cst_14 [0] : vector<8x128xf32> to vector<128xf32>
    %22 = vector.shape_cast %21 : vector<128xf32> to vector<1x128xf32>
    %cst_15 = arith.constant 1.250000e-01 : f32
    %23 = vector.broadcast %cst_15 : f32 to vector<1x128xf32>
    %24 = arith.mulf %22, %23 : vector<1x128xf32>
    %25 = arith.index_cast %arg0 : i32 to index
    %c0_16 = arith.constant 0 : index
    %26 = vector.load %arg15[%25, %c0_16] : memref<8x128xf32, #tpu.memory_space<vmem>>, vector<1x128xf32>
    tpu.vector_store %arg15[%25, %c0_16], %24 {strides = array<i32>} : memref<8x128xf32, #tpu.memory_space<vmem>>, vector<1x128xf32>,
    %c1_i32 = arith.constant 1 : i32
    %27 = arith.cmpi eq, %arg0, %c1_i32 : i32
    %28 = arith.extui %27 : i1 to i32
    %c0_i32_17 = arith.constant 0 : i32
    %29 = arith.cmpi ne, %28, %c0_i32_17 : i32
    scf.if %29 {
      %c0_18 = arith.constant 0 : index
      %c0_19 = arith.constant 0 : index
      %30 = vector.load %arg15[%c0_18, %c0_19] : memref<8x128xf32, #tpu.memory_space<vmem>>, vector<8x128xf32>
      %31 = arith.truncf %30 : vector<8x128xf32> to vector<8x128xbf16>
      %c0_20 = arith.constant 0 : index
      %c0_21 = arith.constant 0 : index
      %32 = vector.load %arg6[%c0_20, %c0_21] : memref<128x128xbf16, #tpu.memory_space<vmem>>, vector<128x128xbf16>
      %cst_22 = arith.constant dense<0.000000e+00> : vector<8x128xf32>
      %33 = tpu.matmul %31, %32, %cst_22 {dimension_numbers = #tpu.dot_dimension_numbers<[1], [0], [0], [1], [0, 0, 1, 1], [], []>} : vector<8x128xbf16>, vector<128x128xbf16>, vector<8x128xf32> -> vector<8x128xf32>
      %c0_23 = arith.constant 0 : index
      %c0_24 = arith.constant 0 : index
      %34 = vector.load %arg7[%c0_23, %c0_24] : memref<1x128xf32, #tpu.memory_space<vmem>>, vector<1x128xf32>
      %35 = vector.broadcast %34 : vector<1x128xf32> to vector<8x128xf32>
      %36 = arith.addf %33, %35 : vector<8x128xf32>
      %37 = arith.truncf %36 : vector<8x128xf32> to vector<8x128xbf16>
      %c0_25 = arith.constant 0 : index
      %c0_26 = arith.constant 0 : index
      %38 = vector.load %arg8[%c0_25, %c0_26] : memref<128x128xbf16, #tpu.memory_space<vmem>>, vector<128x128xbf16>
      %cst_27 = arith.constant dense<0.000000e+00> : vector<8x128xf32>
      %39 = tpu.matmul %37, %38, %cst_27 {dimension_numbers = #tpu.dot_dimension_numbers<[1], [0], [0], [1], [0, 0, 1, 1], [], []>} : vector<8x128xbf16>, vector<128x128xbf16>, vector<8x128xf32> -> vector<8x128xf32>
      %c0_28 = arith.constant 0 : index
      %c0_29 = arith.constant 0 : index
      %40 = vector.load %arg9[%c0_28, %c0_29] : memref<1x128xf32, #tpu.memory_space<vmem>>, vector<1x128xf32>
      %41 = vector.broadcast %40 : vector<1x128xf32> to vector<8x128xf32>
      %42 = arith.addf %39, %41 : vector<8x128xf32>
      %cst_30 = arith.constant 0.000000e+00 : f32
      %43 = vector.broadcast %cst_30 : f32 to vector<8x128xf32>
      %44 = arith.maximumf %42, %43 : vector<8x128xf32>
      %45 = arith.truncf %44 : vector<8x128xf32> to vector<8x128xbf16>
      %c0_31 = arith.constant 0 : index
      %c0_32 = arith.constant 0 : index
      %46 = vector.load %arg10[%c0_31, %c0_32] : memref<128x128xbf16, #tpu.memory_space<vmem>>, vector<128x128xbf16>
      %cst_33 = arith.constant dense<0.000000e+00> : vector<8x128xf32>
      %47 = tpu.matmul %45, %46, %cst_33 {dimension_numbers = #tpu.dot_dimension_numbers<[1], [0], [0], [1], [0, 0, 1, 1], [], []>} : vector<8x128xbf16>, vector<128x128xbf16>, vector<8x128xf32> -> vector<8x128xf32>
      %c0_34 = arith.constant 0 : index
      %c0_35 = arith.constant 0 : index
      %48 = vector.load %arg11[%c0_34, %c0_35] : memref<1x128xf32, #tpu.memory_space<vmem>>, vector<1x128xf32>
      %49 = vector.broadcast %48 : vector<1x128xf32> to vector<8x128xf32>
      %50 = arith.addf %47, %49 : vector<8x128xf32>
      %cst_36 = arith.constant 0.000000e+00 : f32
      %51 = vector.broadcast %cst_36 : f32 to vector<8x128xf32>
      %52 = arith.maximumf %50, %51 : vector<8x128xf32>
      %53 = arith.truncf %52 : vector<8x128xf32> to vector<8x128xbf16>
      %c0_37 = arith.constant 0 : index
      %c0_38 = arith.constant 0 : index
      %54 = vector.load %arg12[%c0_37, %c0_38] : memref<128x128xbf16, #tpu.memory_space<vmem>>, vector<128x128xbf16>
      %cst_39 = arith.constant dense<0.000000e+00> : vector<8x128xf32>
      %55 = tpu.matmul %53, %54, %cst_39 {dimension_numbers = #tpu.dot_dimension_numbers<[1], [0], [0], [1], [0, 0, 1, 1], [], []>} : vector<8x128xbf16>, vector<128x128xbf16>, vector<8x128xf32> -> vector<8x128xf32>
      %c0_40 = arith.constant 0 : index
      %c0_41 = arith.constant 0 : index
      %56 = vector.load %arg13[%c0_40, %c0_41] : memref<1x128xf32, #tpu.memory_space<vmem>>, vector<1x128xf32>
      %57 = vector.broadcast %56 : vector<1x128xf32> to vector<8x128xf32>
      %58 = arith.addf %55, %57 : vector<8x128xf32>
      %c0_42 = arith.constant 0 : index
      %c0_43 = arith.constant 0 : index
      %59 = vector.load %arg14[%c0_42, %c0_43] : memref<8x128xf32, #tpu.memory_space<vmem>>, vector<8x128xf32>
      tpu.vector_store %arg14[%c0_42, %c0_43], %58 {strides = array<i32>} : memref<8x128xf32, #tpu.memory_space<vmem>>, vector<8x128xf32>,
    } else {
    }
    return
  }
  func.func @transform_0(%arg0: i32) -> (i32, i32, i32) {
    %c0_i32 = arith.constant 0 : i32
    %c0_i32_0 = arith.constant 0 : i32
    %c0_i32_1 = arith.constant 0 : i32
    return %arg0, %c0_i32, %c0_i32_0 : i32, i32, i32
  }
  func.func @transform_1(%arg0: i32) -> (i32, i32) {
    %c0_i32 = arith.constant 0 : i32
    %c0_i32_0 = arith.constant 0 : i32
    %c0_i32_1 = arith.constant 0 : i32
    return %c0_i32, %c0_i32_0 : i32, i32
  }
  func.func @transform_2(%arg0: i32) -> (i32, i32) {
    %c0_i32 = arith.constant 0 : i32
    %c0_i32_0 = arith.constant 0 : i32
    %c0_i32_1 = arith.constant 0 : i32
    return %c0_i32, %c0_i32_0 : i32, i32
  }
  func.func @transform_3(%arg0: i32) -> (i32, i32) {
    %c0_i32 = arith.constant 0 : i32
    %c0_i32_0 = arith.constant 0 : i32
    %c0_i32_1 = arith.constant 0 : i32
    return %c0_i32, %c0_i32_0 : i32, i32
  }
  func.func @transform_4(%arg0: i32) -> (i32, i32) {
    %c0_i32 = arith.constant 0 : i32
    %c0_i32_0 = arith.constant 0 : i32
    %c0_i32_1 = arith.constant 0 : i32
    return %c0_i32, %c0_i32_0 : i32, i32
  }
  func.func @transform_5(%arg0: i32) -> (i32, i32) {
    %c0_i32 = arith.constant 0 : i32
    %c0_i32_0 = arith.constant 0 : i32
    %c0_i32_1 = arith.constant 0 : i32
    return %c0_i32, %c0_i32_0 : i32, i32
  }
  func.func @transform_6(%arg0: i32) -> (i32, i32) {
    %c0_i32 = arith.constant 0 : i32
    %c0_i32_0 = arith.constant 0 : i32
    %c0_i32_1 = arith.constant 0 : i32
    return %c0_i32, %c0_i32_0 : i32, i32
  }
  func.func @transform_7(%arg0: i32) -> (i32, i32) {
    %c0_i32 = arith.constant 0 : i32
    %c0_i32_0 = arith.constant 0 : i32
    %c0_i32_1 = arith.constant 0 : i32
    return %c0_i32, %c0_i32_0 : i32, i32
  }
  func.func @transform_8(%arg0: i32) -> (i32, i32) {
    %c0_i32 = arith.constant 0 : i32
    %c0_i32_0 = arith.constant 0 : i32
    %c0_i32_1 = arith.constant 0 : i32
    return %c0_i32, %c0_i32_0 : i32, i32
  }
  func.func @transform_9(%arg0: i32) -> (i32, i32) {
    %c0_i32 = arith.constant 0 : i32
    %c0_i32_0 = arith.constant 0 : i32
    %c0_i32_1 = arith.constant 0 : i32
    return %c0_i32, %c0_i32_0 : i32, i32
  }
  func.func @transform_10(%arg0: i32) -> (i32, i32) {
    %c0_i32 = arith.constant 0 : i32
    %c0_i32_0 = arith.constant 0 : i32
    %c0_i32_1 = arith.constant 0 : i32
    return %c0_i32, %c0_i32_0 : i32, i32
  }
  func.func @transform_11(%arg0: i32) -> (i32, i32) {
    %c0_i32 = arith.constant 0 : i32
    %c0_i32_0 = arith.constant 0 : i32
    %c0_i32_1 = arith.constant 0 : i32
    return %c0_i32, %c0_i32_0 : i32, i32
  }
  func.func @transform_12(%arg0: i32) -> (i32, i32) {
    %c0_i32 = arith.constant 0 : i32
    %c0_i32_0 = arith.constant 0 : i32
    %c0_i32_1 = arith.constant 0 : i32
    return %c0_i32, %c0_i32_0 : i32, i32
  }
  func.func @transform_13(%arg0: i32) -> (i32, i32) {
    %c0_i32 = arith.constant 0 : i32
    %c0_i32_0 = arith.constant 0 : i32
    %c0_i32_1 = arith.constant 0 : i32
    return %c0_i32, %c0_i32_0 : i32, i32
  }
}

</mosaic_0001>

<llo_original>
// kernel: tpu_custom_call.1
$region0: #{tpu_custom_call.1}
  #allocation0 [shape = 'u32[]', space=smem, size = 0x4, offset = 0x4, fixed_abs, tag = 'smem constant byte address 0x4 - core index']
  #allocation1 [shape = 'u32[144,128]{1,0:T(1,128)}', space=vmem, size = 0x12000, scoped, tag = 'internal scratch']
  #allocation2 [shape = 'f32[8,128]{1,0:T(8,128)}', space=vmem, size = 0x1000, scoped, tag = 'scratch operand']
  %s0 = inlined_call_operand.hbm [shape: f32[2,8,128], index: 0, kind: input, shape index: {}]
  %s1 = inlined_call_operand.hbm [shape: bf16[128,128], index: 1, kind: input, shape index: {}]
  %s2 = inlined_call_operand.vmem [shape: f32[1,128], index: 2, kind: input, shape index: {}]
  %s3 = inlined_call_operand.hbm [shape: bf16[128,128], index: 3, kind: input, shape index: {}]
  %s4 = inlined_call_operand.vmem [shape: f32[1,128], index: 4, kind: input, shape index: {}]
  %s5 = inlined_call_operand.hbm [shape: bf16[128,128], index: 5, kind: input, shape index: {}]
  %s6 = inlined_call_operand.vmem [shape: f32[1,128], index: 6, kind: input, shape index: {}]
  %s7 = inlined_call_operand.hbm [shape: bf16[128,128], index: 7, kind: input, shape index: {}]
  %s8 = inlined_call_operand.vmem [shape: f32[1,128], index: 8, kind: input, shape index: {}]
  %s9 = inlined_call_operand.hbm [shape: bf16[128,128], index: 9, kind: input, shape index: {}]
  %s10 = inlined_call_operand.vmem [shape: f32[1,128], index: 10, kind: input, shape index: {}]
  %s11 = inlined_call_operand.hbm [shape: bf16[128,128], index: 11, kind: input, shape index: {}]
  %s12 = inlined_call_operand.vmem [shape: f32[1,128], index: 12, kind: input, shape index: {}]
  %s13 = inlined_call_operand.hbm [shape: f32[8,128], index: 13, kind: output, shape index: {}]
  %s14 = sld [smem:[#allocation0]]
  $region121: #{tpu_custom_call.1} parent=0
    _
  %s16 = ssub.s32 1, %s14
  %s17 = scalar_select 0, %s16, %s14
  $region1: #{tpu_custom_call.1} parent=0
    #allocation3 [shape = 'u8[8192]{0}', space=vmem, size = 0x2000, scoped, tag = 'input window, operand 0']
    #allocation4 [shape = 's32[2]{0}', space=sflag, size = 0x8, scoped, tag = 'scoped memory for tpu_custom_call.1']
    #allocation5 [shape = 's32[2]{0}', space=sflag, size = 0x8, scoped, tag = 'scoped memory for tpu_custom_call.1']
    #allocation6 [shape = 'u8[32768]{0}', space=vmem, size = 0x8000, scoped, tag = 'input window, operand 1, single buffered']
    #allocation7 [shape = 's32[1]{0}', space=sflag, size = 0x4, scoped, tag = 'scoped memory for tpu_custom_call.1']
    #allocation8 [shape = 'u8[32768]{0}', space=vmem, size = 0x8000, scoped, tag = 'input window, operand 3, single buffered']
    #allocation9 [shape = 'u8[32768]{0}', space=vmem, size = 0x8000, scoped, tag = 'input window, operand 5, single buffered']
    #allocation10 [shape = 's32[1]{0}', space=sflag, size = 0x4, scoped, tag = 'scoped memory for tpu_custom_call.1']
    #allocation11 [shape = 'u8[32768]{0}', space=vmem, size = 0x8000, scoped, tag = 'input window, operand 7, single buffered']
    #allocation12 [shape = 'u8[32768]{0}', space=vmem, size = 0x8000, scoped, tag = 'input window, operand 9, single buffered']
    #allocation13 [shape = 's32[1]{0}', space=sflag, size = 0x4, scoped, tag = 'scoped memory for tpu_custom_call.1']
    #allocation14 [shape = 'u8[32768]{0}', space=vmem, size = 0x8000, scoped, tag = 'input window, operand 11, single buffered']
    #allocation15 [shape = 'u8[4096]{0}', space=vmem, size = 0x1000, scoped, tag = 'output window, operand 0, single buffered']
    %18 = vsyncpa [#allocation4], 0
    %s19 = scalar_lea.sflag [#allocation4], 1
    %20 = vsyncpa %s19, 0
    %21 = vsyncpa [#allocation7], 0
    %22 = vsyncpa [#allocation10], 0
    %23 = vsyncpa [#allocation13], 0
    %24 = vsyncpa [#allocation5], 0
    loop: start=0, step=1, limit=4
    $region2: #{tpu_custom_call.1} parent=1 // loop_pre_header
      _
    $region3: #{tpu_custom_call.1} parent=1 // loop_header
      %s26 = sphi 0, %s30
      %p27 = scmp.ge.s32.totalorder %s26, 4
      %s36 = sphi 0, %s38
      %s39 = sphi 0, %s36
      %s40 = sphi 0, %s39
      %s56 = sphi 0, %s40
      %s60 = sphi 0, %s60
      %s62 = sphi 0, %s60
      %s63 = sphi 0, %s62
      %s77 = sphi 0, %s63
      %s81 = sphi 0, %s81
      %s83 = sphi 0, %s81
      %s84 = sphi 0, %s83
      %s98 = sphi 0, %s84
      %s102 = sphi 0, %s102
      %s104 = sphi 0, %s102
      %s105 = sphi 0, %s104
      %s119 = sphi 0, %s105
      %s123 = sphi 0, %s123
      %s125 = sphi 0, %s123
      %s126 = sphi 0, %s125
      %s140 = sphi 0, %s126
      %s144 = sphi 0, %s144
      %s146 = sphi 0, %s144
      %s147 = sphi 0, %s146
      %s161 = sphi 0, %s147
      %s165 = sphi 0, %s165
      %s167 = sphi 0, %s165
      %s168 = sphi 0, %s167
      %s182 = sphi 0, %s168
      %s186 = sphi 0, %s186
      %s188 = sphi 0, %s186
      %s189 = sphi 0, %s188
      %s203 = sphi 0, %s189
      %s207 = sphi 0, %s207
      %s209 = sphi 0, %s207
      %s210 = sphi 0, %s209
      %s224 = sphi 0, %s210
      %s228 = sphi 0, %s228
      %s230 = sphi 0, %s228
      %s231 = sphi 0, %s230
      %s245 = sphi 0, %s231
      %s249 = sphi 0, %s249
      %s251 = sphi 0, %s249
      %s252 = sphi 0, %s251
      %s266 = sphi 0, %s252
      %s270 = sphi 0, %s270
      %s272 = sphi 0, %s270
      %s273 = sphi 0, %s272
      %s287 = sphi 0, %s273
      %s291 = sphi 0, %s291
      %s293 = sphi 0, %s291
      %s294 = sphi 0, %s293
      %s308 = sphi 0, %s294
      %s312 = sphi 0, %s312
      %s314 = sphi 0, %s312
      %s315 = sphi 0, %s314
      %s329 = sphi 0, %s315
    $region4: #{tpu_custom_call.1} parent=1 // loop_header_branch
      %29 = sbr.rel (%p27) target = $region8
    $region5: #{tpu_custom_call.1} parent=1 // loop_body
      %s31 = ssub.s32 %s26, 1
      %s32 = ssub.s32 %s26, 2
      %s33 = sadd.s32 %s26, 1
      %s34 = ssub.s32 %s26, %s33
      %p35 = scmp.eq.s32.totalorder %s34, 0
      %s37 = sadd.s32 %s36, 1
      %s38 = scalar_select %p35, %s36, %s37
      %p41 = pneg %p35
      %p42 = scmp.eq.s32.totalorder %s26, 1
      %p43 = por %p41, %p42
      %p44 = scmp.ne.s32.totalorder %s36, %s39
      %p45 = scmp.eq.s32.totalorder %s26, 0
      %p46 = por %p44, %p45
      %p47 = scmp.ne.s32.totalorder %s36, %s39
      %p48 = scmp.eq.s32.totalorder %s31, 1
      %p49 = por %p47, %p48
      %p50 = scmp.ne.s32.totalorder %s39, %s40
      %p51 = scmp.eq.s32.totalorder %s31, 0
      %p52 = por %p50, %p51
      %p53 = scmp.ne.s32.totalorder %s39, %s40
      %p54 = scmp.eq.s32.totalorder %s32, 1
      %p55 = por %p53, %p54
      %p57 = scmp.ne.s32.totalorder %s40, %s56
      %p58 = scmp.eq.s32.totalorder %s32, 0
      %p59 = por %p57, %p58
      %s61 = sadd.s32 %s60, 1
      %p64 = scmp.eq.s32.totalorder %s26, 1
      %p65 = scmp.ne.s32.totalorder %s60, %s62
      %p66 = scmp.eq.s32.totalorder %s26, 0
      %p67 = por %p65, %p66
      %p68 = scmp.ne.s32.totalorder %s60, %s62
      %p69 = scmp.eq.s32.totalorder %s31, 1
      %p70 = por %p68, %p69
      %p71 = scmp.ne.s32.totalorder %s62, %s63
      %p72 = scmp.eq.s32.totalorder %s31, 0
      %p73 = por %p71, %p72
      %p74 = scmp.ne.s32.totalorder %s62, %s63
      %p75 = scmp.eq.s32.totalorder %s32, 1
      %p76 = por %p74, %p75
      %p78 = scmp.ne.s32.totalorder %s63, %s77
      %p79 = scmp.eq.s32.totalorder %s32, 0
      %p80 = por %p78, %p79
      %s82 = sadd.s32 %s81, 1
      %p85 = scmp.eq.s32.totalorder %s26, 1
      %p86 = scmp.ne.s32.totalorder %s81, %s83
      %p87 = scmp.eq.s32.totalorder %s26, 0
      %p88 = por %p86, %p87
      %p89 = scmp.ne.s32.totalorder %s81, %s83
      %p90 = scmp.eq.s32.totalorder %s31, 1
      %p91 = por %p89, %p90
      %p92 = scmp.ne.s32.totalorder %s83, %s84
      %p93 = scmp.eq.s32.totalorder %s31, 0
      %p94 = por %p92, %p93
      %p95 = scmp.ne.s32.totalorder %s83, %s84
      %p96 = scmp.eq.s32.totalorder %s32, 1
      %p97 = por %p95, %p96
      %p99 = scmp.ne.s32.totalorder %s84, %s98
      %p100 = scmp.eq.s32.totalorder %s32, 0
      %p101 = por %p99, %p100
      %s103 = sadd.s32 %s102, 1
      %p106 = scmp.eq.s32.totalorder %s26, 1
      %p107 = scmp.ne.s32.totalorder %s102, %s104
      %p108 = scmp.eq.s32.totalorder %s26, 0
      %p109 = por %p107, %p108
      %p110 = scmp.ne.s32.totalorder %s102, %s104
      %p111 = scmp.eq.s32.totalorder %s31, 1
      %p112 = por %p110, %p111
      %p113 = scmp.ne.s32.totalorder %s104, %s105
      %p114 = scmp.eq.s32.totalorder %s31, 0
      %p115 = por %p113, %p114
      %p116 = scmp.ne.s32.totalorder %s104, %s105
      %p117 = scmp.eq.s32.totalorder %s32, 1
      %p118 = por %p116, %p117
      %p120 = scmp.ne.s32.totalorder %s105, %s119
      %p121 = scmp.eq.s32.totalorder %s32, 0
      %p122 = por %p120, %p121
      %s124 = sadd.s32 %s123, 1
      %p127 = scmp.eq.s32.totalorder %s26, 1
      %p128 = scmp.ne.s32.totalorder %s123, %s125
      %p129 = scmp.eq.s32.totalorder %s26, 0
      %p130 = por %p128, %p129
      %p131 = scmp.ne.s32.totalorder %s123, %s125
      %p132 = scmp.eq.s32.totalorder %s31, 1
      %p133 = por %p131, %p132
      %p134 = scmp.ne.s32.totalorder %s125, %s126
      %p135 = scmp.eq.s32.totalorder %s31, 0
      %p136 = por %p134, %p135
      %p137 = scmp.ne.s32.totalorder %s125, %s126
      %p138 = scmp.eq.s32.totalorder %s32, 1
      %p139 = por %p137, %p138
      %p141 = scmp.ne.s32.totalorder %s126, %s140
      %p142 = scmp.eq.s32.totalorder %s32, 0
      %p143 = por %p141, %p142
      %s145 = sadd.s32 %s144, 1
      %p148 = scmp.eq.s32.totalorder %s26, 1
      %p149 = scmp.ne.s32.totalorder %s144, %s146
      %p150 = scmp.eq.s32.totalorder %s26, 0
      %p151 = por %p149, %p150
      %p152 = scmp.ne.s32.totalorder %s144, %s146
      %p153 = scmp.eq.s32.totalorder %s31, 1
      %p154 = por %p152, %p153
      %p155 = scmp.ne.s32.totalorder %s146, %s147
      %p156 = scmp.eq.s32.totalorder %s31, 0
      %p157 = por %p155, %p156
      %p158 = scmp.ne.s32.totalorder %s146, %s147
      %p159 = scmp.eq.s32.totalorder %s32, 1
      %p160 = por %p158, %p159
      %p162 = scmp.ne.s32.totalorder %s147, %s161
      %p163 = scmp.eq.s32.totalorder %s32, 0
      %p164 = por %p162, %p163
      %s166 = sadd.s32 %s165, 1
      %p169 = scmp.eq.s32.totalorder %s26, 1
      %p170 = scmp.ne.s32.totalorder %s165, %s167
      %p171 = scmp.eq.s32.totalorder %s26, 0
      %p172 = por %p170, %p171
      %p173 = scmp.ne.s32.totalorder %s165, %s167
      %p174 = scmp.eq.s32.totalorder %s31, 1
      %p175 = por %p173, %p174
      %p176 = scmp.ne.s32.totalorder %s167, %s168
      %p177 = scmp.eq.s32.totalorder %s31, 0
      %p178 = por %p176, %p177
      %p179 = scmp.ne.s32.totalorder %s167, %s168
      %p180 = scmp.eq.s32.totalorder %s32, 1
      %p181 = por %p179, %p180
      %p183 = scmp.ne.s32.totalorder %s168, %s182
      %p184 = scmp.eq.s32.totalorder %s32, 0
      %p185 = por %p183, %p184
      %s187 = sadd.s32 %s186, 1
      %p190 = scmp.eq.s32.totalorder %s26, 1
      %p191 = scmp.ne.s32.totalorder %s186, %s188
      %p192 = scmp.eq.s32.totalorder %s26, 0
      %p193 = por %p191, %p192
      %p194 = scmp.ne.s32.totalorder %s186, %s188
      %p195 = scmp.eq.s32.totalorder %s31, 1
      %p196 = por %p194, %p195
      %p197 = scmp.ne.s32.totalorder %s188, %s189
      %p198 = scmp.eq.s32.totalorder %s31, 0
      %p199 = por %p197, %p198
      %p200 = scmp.ne.s32.totalorder %s188, %s189
      %p201 = scmp.eq.s32.totalorder %s32, 1
      %p202 = por %p200, %p201
      %p204 = scmp.ne.s32.totalorder %s189, %s203
      %p205 = scmp.eq.s32.totalorder %s32, 0
      %p206 = por %p204, %p205
      %s208 = sadd.s32 %s207, 1
      %p211 = scmp.eq.s32.totalorder %s26, 1
      %p212 = scmp.ne.s32.totalorder %s207, %s209
      %p213 = scmp.eq.s32.totalorder %s26, 0
      %p214 = por %p212, %p213
      %p215 = scmp.ne.s32.totalorder %s207, %s209
      %p216 = scmp.eq.s32.totalorder %s31, 1
      %p217 = por %p215, %p216
      %p218 = scmp.ne.s32.totalorder %s209, %s210
      %p219 = scmp.eq.s32.totalorder %s31, 0
      %p220 = por %p218, %p219
      %p221 = scmp.ne.s32.totalorder %s209, %s210
      %p222 = scmp.eq.s32.totalorder %s32, 1
      %p223 = por %p221, %p222
      %p225 = scmp.ne.s32.totalorder %s210, %s224
      %p226 = scmp.eq.s32.totalorder %s32, 0
      %p227 = por %p225, %p226
      %s229 = sadd.s32 %s228, 1
      %p232 = scmp.eq.s32.totalorder %s26, 1
      %p233 = scmp.ne.s32.totalorder %s228, %s230
      %p234 = scmp.eq.s32.totalorder %s26, 0
      %p235 = por %p233, %p234
      %p236 = scmp.ne.s32.totalorder %s228, %s230
      %p237 = scmp.eq.s32.totalorder %s31, 1
      %p238 = por %p236, %p237
      %p239 = scmp.ne.s32.totalorder %s230, %s231
      %p240 = scmp.eq.s32.totalorder %s31, 0
      %p241 = por %p239, %p240
      %p242 = scmp.ne.s32.totalorder %s230, %s231
      %p243 = scmp.eq.s32.totalorder %s32, 1
      %p244 = por %p242, %p243
      %p246 = scmp.ne.s32.totalorder %s231, %s245
      %p247 = scmp.eq.s32.totalorder %s32, 0
      %p248 = por %p246, %p247
      %s250 = sadd.s32 %s249, 1
      %p253 = scmp.eq.s32.totalorder %s26, 1
      %p254 = scmp.ne.s32.totalorder %s249, %s251
      %p255 = scmp.eq.s32.totalorder %s26, 0
      %p256 = por %p254, %p255
      %p257 = scmp.ne.s32.totalorder %s249, %s251
      %p258 = scmp.eq.s32.totalorder %s31, 1
      %p259 = por %p257, %p258
      %p260 = scmp.ne.s32.totalorder %s251, %s252
      %p261 = scmp.eq.s32.totalorder %s31, 0
      %p262 = por %p260, %p261
      %p263 = scmp.ne.s32.totalorder %s251, %s252
      %p264 = scmp.eq.s32.totalorder %s32, 1
      %p265 = por %p263, %p264
      %p267 = scmp.ne.s32.totalorder %s252, %s266
      %p268 = scmp.eq.s32.totalorder %s32, 0
      %p269 = por %p267, %p268
      %s271 = sadd.s32 %s270, 1
      %p274 = scmp.eq.s32.totalorder %s26, 1
      %p275 = scmp.ne.s32.totalorder %s270, %s272
      %p276 = scmp.eq.s32.totalorder %s26, 0
      %p277 = por %p275, %p276
      %p278 = scmp.ne.s32.totalorder %s270, %s272
      %p279 = scmp.eq.s32.totalorder %s31, 1
      %p280 = por %p278, %p279
      %p281 = scmp.ne.s32.totalorder %s272, %s273
      %p282 = scmp.eq.s32.totalorder %s31, 0
      %p283 = por %p281, %p282
      %p284 = scmp.ne.s32.totalorder %s272, %s273
      %p285 = scmp.eq.s32.totalorder %s32, 1
      %p286 = por %p284, %p285
      %p288 = scmp.ne.s32.totalorder %s273, %s287
      %p289 = scmp.eq.s32.totalorder %s32, 0
      %p290 = por %p288, %p289
      %s292 = sadd.s32 %s291, 1
      %p295 = scmp.eq.s32.totalorder %s26, 1
      %p296 = scmp.ne.s32.totalorder %s291, %s293
      %p297 = scmp.eq.s32.totalorder %s26, 0
      %p298 = por %p296, %p297
      %p299 = scmp.ne.s32.totalorder %s291, %s293
      %p300 = scmp.eq.s32.totalorder %s31, 1
      %p301 = por %p299, %p300
      %p302 = scmp.ne.s32.totalorder %s293, %s294
      %p303 = scmp.eq.s32.totalorder %s31, 0
      %p304 = por %p302, %p303
      %p305 = scmp.ne.s32.totalorder %s293, %s294
      %p306 = scmp.eq.s32.totalorder %s32, 1
      %p307 = por %p305, %p306
      %p309 = scmp.ne.s32.totalorder %s294, %s308
      %p310 = scmp.eq.s32.totalorder %s32, 0
      %p311 = por %p309, %p310
      %s313 = sadd.s32 %s312, 1
      %p316 = scmp.eq.s32.totalorder %s26, 1
      %p317 = scmp.ne.s32.totalorder %s312, %s314
      %p318 = scmp.eq.s32.totalorder %s26, 0
      %p319 = por %p317, %p318
      %p320 = scmp.ne.s32.totalorder %s312, %s314
      %p321 = scmp.eq.s32.totalorder %s31, 1
      %p322 = por %p320, %p321
      %p323 = scmp.ne.s32.totalorder %s314, %s315
      %p324 = scmp.eq.s32.totalorder %s31, 0
      %p325 = por %p323, %p324
      %p326 = scmp.ne.s32.totalorder %s314, %s315
      %p327 = scmp.eq.s32.totalorder %s32, 1
      %p328 = por %p326, %p327
      %p330 = scmp.ne.s32.totalorder %s315, %s329
      %p331 = scmp.eq.s32.totalorder %s32, 0
      %p332 = por %p330, %p331
      %p333 = scmp.le.s32.totalorder 1, %s26
      %p334 = scmp.lt.s32.totalorder %s26, 3
      %p335 = pnand %p333, %p334
      %p336 = pneg %p335
      // Predicated region
      $region9: #{tpu_custom_call.1} parent=5 // pred_check
        _
      $region10: #{tpu_custom_call.1} parent=5 // pred_check_branch
        %338 = sbr.rel (%p335) target = $region12
      $region11: #{tpu_custom_call.1} parent=5 // pred_region
        %s339 = ssub.s32 %s26, 1
        // Predicated region
        $region13: #{tpu_custom_call.1} parent=11 // pred_check
          %p340 = pneg %p73
        $region14: #{tpu_custom_call.1} parent=11 // pred_check_branch
          %342 = sbr.rel (%p340) target = $region16
        $region15: #{tpu_custom_call.1} parent=11 // pred_region
          %s344 = ssub.s32 1024, 1024
          %345 = vsyncadd [#allocation7], %s344
          %s346 = sshll.u32 [#allocation6], 4
          %s347 = int_to_ptr.vmem [resolvable:$true] %s346
          %352 = dma.hbm_to_vmem [thread:$0]  %s1, 1024, %s347, [#allocation7], 64, 64, 4
        $region16: #{tpu_custom_call.1} parent=11 // pred_fallthru
          _
        // Predicated region
        $region17: #{tpu_custom_call.1} parent=11 // pred_check
          %p353 = pneg %p94
        $region18: #{tpu_custom_call.1} parent=11 // pred_check_branch
          %355 = sbr.rel (%p353) target = $region20
        $region19: #{tpu_custom_call.1} parent=11 // pred_region
          _
        $region20: #{tpu_custom_call.1} parent=11 // pred_fallthru
          _
        // Predicated region
        $region21: #{tpu_custom_call.1} parent=11 // pred_check
          %p356 = pneg %p115
        $region22: #{tpu_custom_call.1} parent=11 // pred_check_branch
          %358 = sbr.rel (%p356) target = $region24
        $region23: #{tpu_custom_call.1} parent=11 // pred_region
          %s360 = ssub.s32 1024, 1024
          %361 = vsyncadd [#allocation7], %s360
          %s362 = sshll.u32 [#allocation8], 4
          %s363 = int_to_ptr.vmem [resolvable:$true] %s362
          %368 = dma.hbm_to_vmem [thread:$0]  %s3, 1024, %s363, [#allocation7], 64, 64, 4
        $region24: #{tpu_custom_call.1} parent=11 // pred_fallthru
          _
        // Predicated region
        $region25: #{tpu_custom_call.1} parent=11 // pred_check
          %p369 = pneg %p136
        $region26: #{tpu_custom_call.1} parent=11 // pred_check_branch
          %371 = sbr.rel (%p369) target = $region28
        $region27: #{tpu_custom_call.1} parent=11 // pred_region
          _
        $region28: #{tpu_custom_call.1} parent=11 // pred_fallthru
          _
        // Predicated region
        $region29: #{tpu_custom_call.1} parent=11 // pred_check
          %p372 = pneg %p157
        $region30: #{tpu_custom_call.1} parent=11 // pred_check_branch
          %374 = sbr.rel (%p372) target = $region32
        $region31: #{tpu_custom_call.1} parent=11 // pred_region
          %s376 = ssub.s32 1024, 1024
          %377 = vsyncadd [#allocation10], %s376
          %s378 = sshll.u32 [#allocation9], 4
          %s379 = int_to_ptr.vmem [resolvable:$true] %s378
          %384 = dma.hbm_to_vmem [thread:$0]  %s5, 1024, %s379, [#allocation10], 64, 64, 4
        $region32: #{tpu_custom_call.1} parent=11 // pred_fallthru
          _
        // Predicated region
        $region33: #{tpu_custom_call.1} parent=11 // pred_check
          %p385 = pneg %p178
        $region34: #{tpu_custom_call.1} parent=11 // pred_check_branch
          %387 = sbr.rel (%p385) target = $region36
        $region35: #{tpu_custom_call.1} parent=11 // pred_region
          _
        $region36: #{tpu_custom_call.1} parent=11 // pred_fallthru
          _
        // Predicated region
        $region37: #{tpu_custom_call.1} parent=11 // pred_check
          %p388 = pneg %p199
        $region38: #{tpu_custom_call.1} parent=11 // pred_check_branch
          %390 = sbr.rel (%p388) target = $region40
        $region39: #{tpu_custom_call.1} parent=11 // pred_region
          %s392 = ssub.s32 1024, 1024
          %393 = vsyncadd [#allocation10], %s392
          %s394 = sshll.u32 [#allocation11], 4
          %s395 = int_to_ptr.vmem [resolvable:$true] %s394
          %400 = dma.hbm_to_vmem [thread:$0]  %s7, 1024, %s395, [#allocation10], 64, 64, 4
        $region40: #{tpu_custom_call.1} parent=11 // pred_fallthru
          _
        // Predicated region
        $region41: #{tpu_custom_call.1} parent=11 // pred_check
          %p401 = pneg %p220
        $region42: #{tpu_custom_call.1} parent=11 // pred_check_branch
          %403 = sbr.rel (%p401) target = $region44
        $region43: #{tpu_custom_call.1} parent=11 // pred_region
          _
        $region44: #{tpu_custom_call.1} parent=11 // pred_fallthru
          _
        // Predicated region
        $region45: #{tpu_custom_call.1} parent=11 // pred_check
          %p404 = pneg %p241
        $region46: #{tpu_custom_call.1} parent=11 // pred_check_branch
          %406 = sbr.rel (%p404) target = $region48
        $region47: #{tpu_custom_call.1} parent=11 // pred_region
          %s408 = ssub.s32 1024, 1024
          %409 = vsyncadd [#allocation13], %s408
          %s410 = sshll.u32 [#allocation12], 4
          %s411 = int_to_ptr.vmem [resolvable:$true] %s410
          %416 = dma.hbm_to_vmem [thread:$0]  %s9, 1024, %s411, [#allocation13], 64, 64, 4
        $region48: #{tpu_custom_call.1} parent=11 // pred_fallthru
          _
        // Predicated region
        $region49: #{tpu_custom_call.1} parent=11 // pred_check
          %p417 = pneg %p262
        $region50: #{tpu_custom_call.1} parent=11 // pred_check_branch
          %419 = sbr.rel (%p417) target = $region52
        $region51: #{tpu_custom_call.1} parent=11 // pred_region
          _
        $region52: #{tpu_custom_call.1} parent=11 // pred_fallthru
          _
        // Predicated region
        $region53: #{tpu_custom_call.1} parent=11 // pred_check
          %p420 = pneg %p283
        $region54: #{tpu_custom_call.1} parent=11 // pred_check_branch
          %422 = sbr.rel (%p420) target = $region56
        $region55: #{tpu_custom_call.1} parent=11 // pred_region
          %s424 = ssub.s32 1024, 1024
          %425 = vsyncadd [#allocation13], %s424
          %s426 = sshll.u32 [#allocation14], 4
          %s427 = int_to_ptr.vmem [resolvable:$true] %s426
          %432 = dma.hbm_to_vmem [thread:$0]  %s11, 1024, %s427, [#allocation13], 64, 64, 4
        $region56: #{tpu_custom_call.1} parent=11 // pred_fallthru
          _
        // Predicated region
        $region57: #{tpu_custom_call.1} parent=11 // pred_check
          %p433 = pneg %p304
        $region58: #{tpu_custom_call.1} parent=11 // pred_check_branch
          %435 = sbr.rel (%p433) target = $region60
        $region59: #{tpu_custom_call.1} parent=11 // pred_region
          _
        $region60: #{tpu_custom_call.1} parent=11 // pred_fallthru
          _
      $region12: #{tpu_custom_call.1} parent=5 // pred_fallthru
        _
      %p436 = scmp.lt.s32.totalorder %s26, 2
      // Predicated region
      $region61: #{tpu_custom_call.1} parent=5 // pred_check
        %p437 = pneg %p436
      $region62: #{tpu_custom_call.1} parent=5 // pred_check_branch
        %439 = sbr.rel (%p437) target = $region64
      $region63: #{tpu_custom_call.1} parent=5 // pred_region
        // Predicated region
        $region65: #{tpu_custom_call.1} parent=63 // pred_check
          %p440 = pneg %p46
        $region66: #{tpu_custom_call.1} parent=63 // pred_check_branch
          %442 = sbr.rel (%p440) target = $region68
        $region67: #{tpu_custom_call.1} parent=63 // pred_region
          %s443 = sand.u32 %s36, 1
          %s444 = scalar_lea.sflag [#allocation4], %s443
          %s445 = sand.u32 %s36, 1
          %s446 = smul.addr %s445, 8
          %s447 = scalar_lea.vmem [#allocation3], %s446
          %s449 = ssub.s32 128, 128
          %450 = vsyncadd %s444, %s449
          %s451 = smul.addr %s26, 128
          %s452 = scalar_lea.hbm %s0, %s451
          %s454 = sshll.u32 %s447, 4
          %s455 = int_to_ptr.vmem [resolvable:$true] %s454
          %457 = dma.hbm_to_vmem [thread:$0]  %s452, 128, %s455, %s444
        $region68: #{tpu_custom_call.1} parent=63 // pred_fallthru
          _
      $region64: #{tpu_custom_call.1} parent=5 // pred_fallthru
        _
      %p458 = scmp.le.s32.totalorder 1, %s26
      %p459 = scmp.lt.s32.totalorder %s26, 3
      %p460 = pnand %p458, %p459
      %p461 = pneg %p460
      // Predicated region
      $region69: #{tpu_custom_call.1} parent=5 // pred_check
        _
      $region70: #{tpu_custom_call.1} parent=5 // pred_check_branch
        %463 = sbr.rel (%p460) target = $region72
      $region71: #{tpu_custom_call.1} parent=5 // pred_region
        %s464 = ssub.s32 %s26, 1
        %s465 = sand.u32 %s39, 1
        %s466 = scalar_lea.sflag [#allocation4], %s465
        %s467 = sand.u32 %s39, 1
        %s468 = smul.addr %s467, 8
        %s469 = scalar_lea.vmem [#allocation3], %s468
        // Predicated region
        $region73: #{tpu_custom_call.1} parent=71 // pred_check
          %p470 = pneg %p52
        $region74: #{tpu_custom_call.1} parent=71 // pred_check_branch
          %472 = sbr.rel (%p470) target = $region76
        $region75: #{tpu_custom_call.1} parent=71 // pred_region
          %473 = dma.done %s466, 128
        $region76: #{tpu_custom_call.1} parent=71 // pred_fallthru
          _
        // Predicated region
        $region77: #{tpu_custom_call.1} parent=71 // pred_check
          %p474 = pneg %p73
        $region78: #{tpu_custom_call.1} parent=71 // pred_check_branch
          %476 = sbr.rel (%p474) target = $region80
        $region79: #{tpu_custom_call.1} parent=71 // pred_region
          %477 = dma.done [#allocation7], 1024
        $region80: #{tpu_custom_call.1} parent=71 // pred_fallthru
          _
        // Predicated region
        $region81: #{tpu_custom_call.1} parent=71 // pred_check
          %p478 = pneg %p115
        $region82: #{tpu_custom_call.1} parent=71 // pred_check_branch
          %480 = sbr.rel (%p478) target = $region84
        $region83: #{tpu_custom_call.1} parent=71 // pred_region
          %481 = dma.done [#allocation7], 1024
        $region84: #{tpu_custom_call.1} parent=71 // pred_fallthru
          _
        // Predicated region
        $region85: #{tpu_custom_call.1} parent=71 // pred_check
          %p482 = pneg %p157
        $region86: #{tpu_custom_call.1} parent=71 // pred_check_branch
          %484 = sbr.rel (%p482) target = $region88
        $region87: #{tpu_custom_call.1} parent=71 // pred_region
          %485 = dma.done [#allocation10], 1024
        $region88: #{tpu_custom_call.1} parent=71 // pred_fallthru
          _
        // Predicated region
        $region89: #{tpu_custom_call.1} parent=71 // pred_check
          %p486 = pneg %p199
        $region90: #{tpu_custom_call.1} parent=71 // pred_check_branch
          %488 = sbr.rel (%p486) target = $region92
        $region91: #{tpu_custom_call.1} parent=71 // pred_region
          %489 = dma.done [#allocation10], 1024
        $region92: #{tpu_custom_call.1} parent=71 // pred_fallthru
          _
        // Predicated region
        $region93: #{tpu_custom_call.1} parent=71 // pred_check
          %p490 = pneg %p241
        $region94: #{tpu_custom_call.1} parent=71 // pred_check_branch
          %492 = sbr.rel (%p490) target = $region96
        $region95: #{tpu_custom_call.1} parent=71 // pred_region
          %493 = dma.done [#allocation13], 1024
        $region96: #{tpu_custom_call.1} parent=71 // pred_fallthru
          _
        // Predicated region
        $region97: #{tpu_custom_call.1} parent=71 // pred_check
          %p494 = pneg %p283
        $region98: #{tpu_custom_call.1} parent=71 // pred_check_branch
          %496 = sbr.rel (%p494) target = $region100
        $region99: #{tpu_custom_call.1} parent=71 // pred_region
          %497 = dma.done [#allocation13], 1024
        $region100: #{tpu_custom_call.1} parent=71 // pred_fallthru
          _
        %s498 = sand.u32 %s39, 1
        %s499 = scalar_lea.sflag [#allocation4], %s498
        %s500 = sand.u32 %s39, 1
        %s501 = smul.addr %s500, 8
        %s502 = scalar_lea.vmem [#allocation3], %s501
        %p503 = pneg %p52
        %p504 = pneg %p49
        %p505 = pneg %p73
        %p506 = pneg %p70
        %p507 = pneg %p94
        %p508 = pneg %p91
        %p509 = pneg %p115
        %p510 = pneg %p112
        %p511 = pneg %p136
        %p512 = pneg %p133
        %p513 = pneg %p157
        %p514 = pneg %p154
        %p515 = pneg %p178
        %p516 = pneg %p175
        %p517 = pneg %p199
        %p518 = pneg %p196
        %p519 = pneg %p220
        %p520 = pneg %p217
        %p521 = pneg %p241
        %p522 = pneg %p238
        %p523 = pneg %p262
        %p524 = pneg %p259
        %p525 = pneg %p283
        %p526 = pneg %p280
        %p527 = pneg %p304
        %p528 = pneg %p301
        %p529 = pneg %p325
        %p530 = pneg %p322
        %p532 = scmp.eq.s32.totalorder %s31, 0
        // Predicated region
        $region101: #{tpu_custom_call.1} parent=71 // pred_check
          %p533 = pneg %p532
        $region102: #{tpu_custom_call.1} parent=71 // pred_check_branch
          %535 = sbr.rel (%p533) target = $region104
        $region103: #{tpu_custom_call.1} parent=71 // pred_region
          %536 = vst [vmem:[#allocation2] sm:$0xff] 0.0
        $region104: #{tpu_custom_call.1} parent=71 // pred_fallthru
          _
        %v537 = vld [vmem:[%s469] sm:$0xff]
        %v538 = vpack.c.bf16 %v537, %v537
        %v539 = vld [vmem:[#allocation6] sm:$0xf]
        %v540 = vld [vmem:[#allocation6 + $0x4] sm:$0xf]
        %v541 = vld [vmem:[#allocation6 + $0x8] sm:$0xf]
        %v542 = vld [vmem:[#allocation6 + $0xc] sm:$0xf]
        %v543 = vld [vmem:[#allocation6 + $0x10] sm:$0xf]
        %v544 = vld [vmem:[#allocation6 + $0x14] sm:$0xf]
        %v545 = vld [vmem:[#allocation6 + $0x18] sm:$0xf]
        %v546 = vld [vmem:[#allocation6 + $0x1c] sm:$0xf]
        %v547 = vld [vmem:[#allocation6 + $0x20] sm:$0xf]
        %v548 = vld [vmem:[#allocation6 + $0x24] sm:$0xf]
        %v549 = vld [vmem:[#allocation6 + $0x28] sm:$0xf]
        %v550 = vld [vmem:[#allocation6 + $0x2c] sm:$0xf]
        %v551 = vld [vmem:[#allocation6 + $0x30] sm:$0xf]
        %v552 = vld [vmem:[#allocation6 + $0x34] sm:$0xf]
        %v553 = vld [vmem:[#allocation6 + $0x38] sm:$0xf]
        %v554 = vld [vmem:[#allocation6 + $0x3c] sm:$0xf]
        %v555 = vld [vmem:[%s2] sm:$0x1]
        %v557 = vlaneseq
        %v558 = vshrl.u32 %v557, 7
        %v559 = vsub.s32 0, %v558
        %v560 = vrot.slane %v555, %v559
        %v578 = vunpack.c.l.b16 %v539
        %v579 = vunpack.c.l.b16 %v540
        %v580 = vunpack.c.l.b16 %v541
        %v581 = vunpack.c.l.b16 %v542
        %v582 = vunpack.c.l.b16 %v543
        %v583 = vunpack.c.l.b16 %v544
        %v584 = vunpack.c.l.b16 %v545
        %v585 = vunpack.c.l.b16 %v546
        %v586 = vunpack.c.l.b16 %v547
        %v587 = vunpack.c.l.b16 %v548
        %v588 = vunpack.c.l.b16 %v549
        %v589 = vunpack.c.l.b16 %v550
        %v590 = vunpack.c.l.b16 %v551
        %v591 = vunpack.c.l.b16 %v552
        %v592 = vunpack.c.l.b16 %v553
        %v593 = vunpack.c.l.b16 %v554
        %v594 = vpack.c.b16 %v579, %v578
        %v595 = vpack.c.b16 %v581, %v580
        %v596 = vpack.c.b16 %v583, %v582
        %v597 = vpack.c.b16 %v585, %v584
        %v598 = vpack.c.b16 %v587, %v586
        %v599 = vpack.c.b16 %v589, %v588
        %v600 = vpack.c.b16 %v591, %v590
        %v601 = vpack.c.b16 %v593, %v592
        %610 = vmatprep.subr.bf16.mxu0 0
        %611 = vmatpush1.bf16.msra.mxu0 %v601
        %612 = vmatprep.subr.bf16.mxu0 0
        %613 = vmatpush1.bf16.msra.mxu0 %v600
        %614 = vmatprep.subr.bf16.mxu0 0
        %615 = vmatpush1.bf16.msra.mxu0 %v599
        %616 = vmatprep.subr.bf16.mxu0 0
        %617 = vmatpush1.bf16.msra.mxu0 %v598
        %618 = vmatprep.subr.bf16.mxu0 0
        %619 = vmatpush1.bf16.msra.mxu0 %v597
        %620 = vmatprep.subr.bf16.mxu0 0
        %621 = vmatpush1.bf16.msra.mxu0 %v596
        %622 = vmatprep.subr.bf16.mxu0 0
        %623 = vmatpush1.bf16.msra.mxu0 %v595
        %624 = vmatprep.subr.bf16.mxu0 0
        %625 = vmatpush1.bf16.msra.mxu0 %v594
        %626 = vmatprep.subr.bf16.mxu0 0
        %627 = vmatpush2.bf16.msra.mxu0 0
        %628 = vmatprep.subr.bf16.mxu0 0
        %629 = vmatpush2.bf16.msra.mxu0 0
        %630 = vmatprep.subr.bf16.mxu0 0
        %631 = vmatpush2.bf16.msra.mxu0 0
        %632 = vmatprep.subr.bf16.mxu0 0
        %633 = vmatpush2.bf16.msra.mxu0 0
        %634 = vmatprep.subr.bf16.mxu0 0
        %635 = vmatpush2.bf16.msra.mxu0 0
        %636 = vmatprep.subr.bf16.mxu0 0
        %637 = vmatpush2.bf16.msra.mxu0 0
        %638 = vmatprep.subr.bf16.mxu0 0
        %639 = vmatpush2.bf16.msra.mxu0 0
        %640 = vmatprep.subr.bf16.mxu0 0
        %641 = vmatpush2.bf16.msra.mxu0 0
        %642 = vmatprep.mubr.bf16.mxu0 0
        %643 = vmatmul.mubr.bf16.gmra.mxu0 %v538
        %v644 = vpop.f32.mrf.mxu0
        %v645 = vadd.f32 %v560, %v644
        %v646 = vpop.f32.mrf.mxu0
        %v647 = vpop.f32.mrf.mxu0
        %v648 = vpop.f32.mrf.mxu0
        %649 = vdwg.mxu0
        %v650 = vmax.f32 %v645, 0.0
        %v651 = vpack.c.bf16 %v650, %v650
        %v652 = vld [vmem:[#allocation8] sm:$0xf]
        %v653 = vld [vmem:[#allocation8 + $0x4] sm:$0xf]
        %v654 = vld [vmem:[#allocation8 + $0x8] sm:$0xf]
        %v655 = vld [vmem:[#allocation8 + $0xc] sm:$0xf]
        %v656 = vld [vmem:[#allocation8 + $0x10] sm:$0xf]
        %v657 = vld [vmem:[#allocation8 + $0x14] sm:$0xf]
        %v658 = vld [vmem:[#allocation8 + $0x18] sm:$0xf]
        %v659 = vld [vmem:[#allocation8 + $0x1c] sm:$0xf]
        %v660 = vld [vmem:[#allocation8 + $0x20] sm:$0xf]
        %v661 = vld [vmem:[#allocation8 + $0x24] sm:$0xf]
        %v662 = vld [vmem:[#allocation8 + $0x28] sm:$0xf]
        %v663 = vld [vmem:[#allocation8 + $0x2c] sm:$0xf]
        %v664 = vld [vmem:[#allocation8 + $0x30] sm:$0xf]
        %v665 = vld [vmem:[#allocation8 + $0x34] sm:$0xf]
        %v666 = vld [vmem:[#allocation8 + $0x38] sm:$0xf]
        %v667 = vld [vmem:[#allocation8 + $0x3c] sm:$0xf]
        %v668 = vld [vmem:[%s4] sm:$0x1]
        %v670 = vlaneseq
        %v671 = vshrl.u32 %v670, 7
        %v672 = vsub.s32 0, %v671
        %v673 = vrot.slane %v668, %v672
        %v691 = vunpack.c.l.b16 %v652
        %v692 = vunpack.c.l.b16 %v653
        %v693 = vunpack.c.l.b16 %v654
        %v694 = vunpack.c.l.b16 %v655
        %v695 = vunpack.c.l.b16 %v656
        %v696 = vunpack.c.l.b16 %v657
        %v697 = vunpack.c.l.b16 %v658
        %v698 = vunpack.c.l.b16 %v659
        %v699 = vunpack.c.l.b16 %v660
        %v700 = vunpack.c.l.b16 %v661
        %v701 = vunpack.c.l.b16 %v662
        %v702 = vunpack.c.l.b16 %v663
        %v703 = vunpack.c.l.b16 %v664
        %v704 = vunpack.c.l.b16 %v665
        %v705 = vunpack.c.l.b16 %v666
        %v706 = vunpack.c.l.b16 %v667
        %v707 = vpack.c.b16 %v692, %v691
        %v708 = vpack.c.b16 %v694, %v693
        %v709 = vpack.c.b16 %v696, %v695
        %v710 = vpack.c.b16 %v698, %v697
        %v711 = vpack.c.b16 %v700, %v699
        %v712 = vpack.c.b16 %v702, %v701
        %v713 = vpack.c.b16 %v704, %v703
        %v714 = vpack.c.b16 %v706, %v705
        %723 = vmatprep.subr.bf16.mxu0 0
        %724 = vmatpush1.bf16.msra.mxu0 %v714
        %725 = vmatprep.subr.bf16.mxu0 0
        %726 = vmatpush1.bf16.msra.mxu0 %v713
        %727 = vmatprep.subr.bf16.mxu0 0
        %728 = vmatpush1.bf16.msra.mxu0 %v712
        %729 = vmatprep.subr.bf16.mxu0 0
        %730 = vmatpush1.bf16.msra.mxu0 %v711
        %731 = vmatprep.subr.bf16.mxu0 0
        %732 = vmatpush1.bf16.msra.mxu0 %v710
        %733 = vmatprep.subr.bf16.mxu0 0
        %734 = vmatpush1.bf16.msra.mxu0 %v709
        %735 = vmatprep.subr.bf16.mxu0 0
        %736 = vmatpush1.bf16.msra.mxu0 %v708
        %737 = vmatprep.subr.bf16.mxu0 0
        %738 = vmatpush1.bf16.msra.mxu0 %v707
        %739 = vmatprep.subr.bf16.mxu0 0
        %740 = vmatpush2.bf16.msra.mxu0 0
        %741 = vmatprep.subr.bf16.mxu0 0
        %742 = vmatpush2.bf16.msra.mxu0 0
        %743 = vmatprep.subr.bf16.mxu0 0
        %744 = vmatpush2.bf16.msra.mxu0 0
        %745 = vmatprep.subr.bf16.mxu0 0
        %746 = vmatpush2.bf16.msra.mxu0 0
        %747 = vmatprep.subr.bf16.mxu0 0
        %748 = vmatpush2.bf16.msra.mxu0 0
        %749 = vmatprep.subr.bf16.mxu0 0
        %750 = vmatpush2.bf16.msra.mxu0 0
        %751 = vmatprep.subr.bf16.mxu0 0
        %752 = vmatpush2.bf16.msra.mxu0 0
        %753 = vmatprep.subr.bf16.mxu0 0
        %754 = vmatpush2.bf16.msra.mxu0 0
        %755 = vmatprep.mubr.bf16.mxu0 0
        %756 = vmatmul.mubr.bf16.gmra.mxu0 %v651
        %v757 = vpop.f32.mrf.mxu0
        %v758 = vadd.f32 %v673, %v757
        %v759 = vpop.f32.mrf.mxu0
        %v760 = vpop.f32.mrf.mxu0
        %v761 = vpop.f32.mrf.mxu0
        %762 = vdwg.mxu0
        %v763 = vmax.f32 %v758, 0.0
        %v764 = vrot.slane %v763, 4
        %v765 = vadd.f32 %v763, %v764
        %v766 = vrot.slane %v765, 2
        %v767 = vadd.f32 %v765, %v766
        %v768 = vrot.slane %v767, 1
        %v769 = vadd.f32 %v767, %v768
        %v770 = vmul.f32 %v769, 0.125
        %s771 = scalar_lea.vmem [#allocation2], %s31
        %772 = vst [vmem:[%s771] sm:$0x1] %v770
        %p773 = scmp.eq.s32.totalorder %s31, 1
        // Predicated region
        $region105: #{tpu_custom_call.1} parent=71 // pred_check
          %p774 = pneg %p773
        $region106: #{tpu_custom_call.1} parent=71 // pred_check_branch
          %776 = sbr.rel (%p774) target = $region108
        $region107: #{tpu_custom_call.1} parent=71 // pred_region
          %v777 = vld [vmem:[#allocation2] sm:$0xff]
          %v778 = vpack.c.bf16 %v777, %v777
          %v779 = vld [vmem:[#allocation9] sm:$0xf]
          %v780 = vld [vmem:[#allocation9 + $0x4] sm:$0xf]
          %v781 = vld [vmem:[#allocation9 + $0x8] sm:$0xf]
          %v782 = vld [vmem:[#allocation9 + $0xc] sm:$0xf]
          %v783 = vld [vmem:[#allocation9 + $0x10] sm:$0xf]
          %v784 = vld [vmem:[#allocation9 + $0x14] sm:$0xf]
          %v785 = vld [vmem:[#allocation9 + $0x18] sm:$0xf]
          %v786 = vld [vmem:[#allocation9 + $0x1c] sm:$0xf]
          %v787 = vld [vmem:[#allocation9 + $0x20] sm:$0xf]
          %v788 = vld [vmem:[#allocation9 + $0x24] sm:$0xf]
          %v789 = vld [vmem:[#allocation9 + $0x28] sm:$0xf]
          %v790 = vld [vmem:[#allocation9 + $0x2c] sm:$0xf]
          %v791 = vld [vmem:[#allocation9 + $0x30] sm:$0xf]
          %v792 = vld [vmem:[#allocation9 + $0x34] sm:$0xf]
          %v793 = vld [vmem:[#allocation9 + $0x38] sm:$0xf]
          %v794 = vld [vmem:[#allocation9 + $0x3c] sm:$0xf]
          %v795 = vld [vmem:[%s6] sm:$0x1]
          %v797 = vlaneseq
          %v798 = vshrl.u32 %v797, 7
          %v799 = vsub.s32 0, %v798
          %v800 = vrot.slane %v795, %v799
          %v818 = vunpack.c.l.b16 %v779
          %v819 = vunpack.c.l.b16 %v780
          %v820 = vunpack.c.l.b16 %v781
          %v821 = vunpack.c.l.b16 %v782
          %v822 = vunpack.c.l.b16 %v783
          %v823 = vunpack.c.l.b16 %v784
          %v824 = vunpack.c.l.b16 %v785
          %v825 = vunpack.c.l.b16 %v786
          %v826 = vunpack.c.l.b16 %v787
          %v827 = vunpack.c.l.b16 %v788
          %v828 = vunpack.c.l.b16 %v789
          %v829 = vunpack.c.l.b16 %v790
          %v830 = vunpack.c.l.b16 %v791
          %v831 = vunpack.c.l.b16 %v792
          %v832 = vunpack.c.l.b16 %v793
          %v833 = vunpack.c.l.b16 %v794
          %v834 = vpack.c.b16 %v819, %v818
          %v835 = vpack.c.b16 %v821, %v820
          %v836 = vpack.c.b16 %v823, %v822
          %v837 = vpack.c.b16 %v825, %v824
          %v838 = vpack.c.b16 %v827, %v826
          %v839 = vpack.c.b16 %v829, %v828
          %v840 = vpack.c.b16 %v831, %v830
          %v841 = vpack.c.b16 %v833, %v832
          %850 = vmatprep.subr.bf16.mxu0 0
          %851 = vmatpush1.bf16.msra.mxu0 %v841
          %852 = vmatprep.subr.bf16.mxu0 0
          %853 = vmatpush1.bf16.msra.mxu0 %v840
          %854 = vmatprep.subr.bf16.mxu0 0
          %855 = vmatpush1.bf16.msra.mxu0 %v839
          %856 = vmatprep.subr.bf16.mxu0 0
          %857 = vmatpush1.bf16.msra.mxu0 %v838
          %858 = vmatprep.subr.bf16.mxu0 0
          %859 = vmatpush1.bf16.msra.mxu0 %v837
          %860 = vmatprep.subr.bf16.mxu0 0
          %861 = vmatpush1.bf16.msra.mxu0 %v836
          %862 = vmatprep.subr.bf16.mxu0 0
          %863 = vmatpush1.bf16.msra.mxu0 %v835
          %864 = vmatprep.subr.bf16.mxu0 0
          %865 = vmatpush1.bf16.msra.mxu0 %v834
          %866 = vmatprep.subr.bf16.mxu0 0
          %867 = vmatpush2.bf16.msra.mxu0 0
          %868 = vmatprep.subr.bf16.mxu0 0
          %869 = vmatpush2.bf16.msra.mxu0 0
          %870 = vmatprep.subr.bf16.mxu0 0
          %871 = vmatpush2.bf16.msra.mxu0 0
          %872 = vmatprep.subr.bf16.mxu0 0
          %873 = vmatpush2.bf16.msra.mxu0 0
          %874 = vmatprep.subr.bf16.mxu0 0
          %875 = vmatpush2.bf16.msra.mxu0 0
          %876 = vmatprep.subr.bf16.mxu0 0
          %877 = vmatpush2.bf16.msra.mxu0 0
          %878 = vmatprep.subr.bf16.mxu0 0
          %879 = vmatpush2.bf16.msra.mxu0 0
          %880 = vmatprep.subr.bf16.mxu0 0
          %881 = vmatpush2.bf16.msra.mxu0 0
          %882 = vmatprep.mubr.bf16.mxu0 0
          %883 = vmatmul.mubr.bf16.gmra.mxu0 %v778
          %v884 = vpop.f32.mrf.mxu0
          %v885 = vadd.f32 %v800, %v884
          %v886 = vpop.f32.mrf.mxu0
          %v887 = vpop.f32.mrf.mxu0
          %v888 = vpop.f32.mrf.mxu0
          %889 = vdwg.mxu0
          %v890 = vpack.c.bf16 %v885, %v885
          %v891 = vld [vmem:[#allocation11] sm:$0xf]
          %v892 = vld [vmem:[#allocation11 + $0x4] sm:$0xf]
          %v893 = vld [vmem:[#allocation11 + $0x8] sm:$0xf]
          %v894 = vld [vmem:[#allocation11 + $0xc] sm:$0xf]
          %v895 = vld [vmem:[#allocation11 + $0x10] sm:$0xf]
          %v896 = vld [vmem:[#allocation11 + $0x14] sm:$0xf]
          %v897 = vld [vmem:[#allocation11 + $0x18] sm:$0xf]
          %v898 = vld [vmem:[#allocation11 + $0x1c] sm:$0xf]
          %v899 = vld [vmem:[#allocation11 + $0x20] sm:$0xf]
          %v900 = vld [vmem:[#allocation11 + $0x24] sm:$0xf]
          %v901 = vld [vmem:[#allocation11 + $0x28] sm:$0xf]
          %v902 = vld [vmem:[#allocation11 + $0x2c] sm:$0xf]
          %v903 = vld [vmem:[#allocation11 + $0x30] sm:$0xf]
          %v904 = vld [vmem:[#allocation11 + $0x34] sm:$0xf]
          %v905 = vld [vmem:[#allocation11 + $0x38] sm:$0xf]
          %v906 = vld [vmem:[#allocation11 + $0x3c] sm:$0xf]
          %v907 = vld [vmem:[%s8] sm:$0x1]
          %v909 = vlaneseq
          %v910 = vshrl.u32 %v909, 7
          %v911 = vsub.s32 0, %v910
          %v912 = vrot.slane %v907, %v911
          %v930 = vunpack.c.l.b16 %v891
          %v931 = vunpack.c.l.b16 %v892
          %v932 = vunpack.c.l.b16 %v893
          %v933 = vunpack.c.l.b16 %v894
          %v934 = vunpack.c.l.b16 %v895
          %v935 = vunpack.c.l.b16 %v896
          %v936 = vunpack.c.l.b16 %v897
          %v937 = vunpack.c.l.b16 %v898
          %v938 = vunpack.c.l.b16 %v899
          %v939 = vunpack.c.l.b16 %v900
          %v940 = vunpack.c.l.b16 %v901
          %v941 = vunpack.c.l.b16 %v902
          %v942 = vunpack.c.l.b16 %v903
          %v943 = vunpack.c.l.b16 %v904
          %v944 = vunpack.c.l.b16 %v905
          %v945 = vunpack.c.l.b16 %v906
          %v946 = vpack.c.b16 %v931, %v930
          %v947 = vpack.c.b16 %v933, %v932
          %v948 = vpack.c.b16 %v935, %v934
          %v949 = vpack.c.b16 %v937, %v936
          %v950 = vpack.c.b16 %v939, %v938
          %v951 = vpack.c.b16 %v941, %v940
          %v952 = vpack.c.b16 %v943, %v942
          %v953 = vpack.c.b16 %v945, %v944
          %962 = vmatprep.subr.bf16.mxu0 0
          %963 = vmatpush1.bf16.msra.mxu0 %v953
          %964 = vmatprep.subr.bf16.mxu0 0
          %965 = vmatpush1.bf16.msra.mxu0 %v952
          %966 = vmatprep.subr.bf16.mxu0 0
          %967 = vmatpush1.bf16.msra.mxu0 %v951
          %968 = vmatprep.subr.bf16.mxu0 0
          %969 = vmatpush1.bf16.msra.mxu0 %v950
          %970 = vmatprep.subr.bf16.mxu0 0
          %971 = vmatpush1.bf16.msra.mxu0 %v949
          %972 = vmatprep.subr.bf16.mxu0 0
          %973 = vmatpush1.bf16.msra.mxu0 %v948
          %974 = vmatprep.subr.bf16.mxu0 0
          %975 = vmatpush1.bf16.msra.mxu0 %v947
          %976 = vmatprep.subr.bf16.mxu0 0
          %977 = vmatpush1.bf16.msra.mxu0 %v946
          %978 = vmatprep.subr.bf16.mxu0 0
          %979 = vmatpush2.bf16.msra.mxu0 0
          %980 = vmatprep.subr.bf16.mxu0 0
          %981 = vmatpush2.bf16.msra.mxu0 0
          %982 = vmatprep.subr.bf16.mxu0 0
          %983 = vmatpush2.bf16.msra.mxu0 0
          %984 = vmatprep.subr.bf16.mxu0 0
          %985 = vmatpush2.bf16.msra.mxu0 0
          %986 = vmatprep.subr.bf16.mxu0 0
          %987 = vmatpush2.bf16.msra.mxu0 0
          %988 = vmatprep.subr.bf16.mxu0 0
          %989 = vmatpush2.bf16.msra.mxu0 0
          %990 = vmatprep.subr.bf16.mxu0 0
          %991 = vmatpush2.bf16.msra.mxu0 0
          %992 = vmatprep.subr.bf16.mxu0 0
          %993 = vmatpush2.bf16.msra.mxu0 0
          %994 = vmatprep.mubr.bf16.mxu0 0
          %995 = vmatmul.mubr.bf16.gmra.mxu0 %v890
          %v996 = vpop.f32.mrf.mxu0
          %v997 = vadd.f32 %v912, %v996
          %v998 = vpop.f32.mrf.mxu0
          %v999 = vpop.f32.mrf.mxu0
          %v1000 = vpop.f32.mrf.mxu0
          %1001 = vdwg.mxu0
          %v1002 = vmax.f32 %v997, 0.0
          %v1003 = vpack.c.bf16 %v1002, %v1002
          %v1004 = vld [vmem:[#allocation12] sm:$0xf]
          %v1005 = vld [vmem:[#allocation12 + $0x4] sm:$0xf]
          %v1006 = vld [vmem:[#allocation12 + $0x8] sm:$0xf]
          %v1007 = vld [vmem:[#allocation12 + $0xc] sm:$0xf]
          %v1008 = vld [vmem:[#allocation12 + $0x10] sm:$0xf]
          %v1009 = vld [vmem:[#allocation12 + $0x14] sm:$0xf]
          %v1010 = vld [vmem:[#allocation12 + $0x18] sm:$0xf]
          %v1011 = vld [vmem:[#allocation12 + $0x1c] sm:$0xf]
          %v1012 = vld [vmem:[#allocation12 + $0x20] sm:$0xf]
          %v1013 = vld [vmem:[#allocation12 + $0x24] sm:$0xf]
          %v1014 = vld [vmem:[#allocation12 + $0x28] sm:$0xf]
          %v1015 = vld [vmem:[#allocation12 + $0x2c] sm:$0xf]
          %v1016 = vld [vmem:[#allocation12 + $0x30] sm:$0xf]
          %v1017 = vld [vmem:[#allocation12 + $0x34] sm:$0xf]
          %v1018 = vld [vmem:[#allocation12 + $0x38] sm:$0xf]
          %v1019 = vld [vmem:[#allocation12 + $0x3c] sm:$0xf]
          %v1020 = vld [vmem:[%s10] sm:$0x1]
          %v1022 = vlaneseq
          %v1023 = vshrl.u32 %v1022, 7
          %v1024 = vsub.s32 0, %v1023
          %v1025 = vrot.slane %v1020, %v1024
          %v1043 = vunpack.c.l.b16 %v1004
          %v1044 = vunpack.c.l.b16 %v1005
          %v1045 = vunpack.c.l.b16 %v1006
          %v1046 = vunpack.c.l.b16 %v1007
          %v1047 = vunpack.c.l.b16 %v1008
          %v1048 = vunpack.c.l.b16 %v1009
          %v1049 = vunpack.c.l.b16 %v1010
          %v1050 = vunpack.c.l.b16 %v1011
          %v1051 = vunpack.c.l.b16 %v1012
          %v1052 = vunpack.c.l.b16 %v1013
          %v1053 = vunpack.c.l.b16 %v1014
          %v1054 = vunpack.c.l.b16 %v1015
          %v1055 = vunpack.c.l.b16 %v1016
          %v1056 = vunpack.c.l.b16 %v1017
          %v1057 = vunpack.c.l.b16 %v1018
          %v1058 = vunpack.c.l.b16 %v1019
          %v1059 = vpack.c.b16 %v1044, %v1043
          %v1060 = vpack.c.b16 %v1046, %v1045
          %v1061 = vpack.c.b16 %v1048, %v1047
          %v1062 = vpack.c.b16 %v1050, %v1049
          %v1063 = vpack.c.b16 %v1052, %v1051
          %v1064 = vpack.c.b16 %v1054, %v1053
          %v1065 = vpack.c.b16 %v1056, %v1055
          %v1066 = vpack.c.b16 %v1058, %v1057
          %1075 = vmatprep.subr.bf16.mxu0 0
          %1076 = vmatpush1.bf16.msra.mxu0 %v1066
          %1077 = vmatprep.subr.bf16.mxu0 0
          %1078 = vmatpush1.bf16.msra.mxu0 %v1065
          %1079 = vmatprep.subr.bf16.mxu0 0
          %1080 = vmatpush1.bf16.msra.mxu0 %v1064
          %1081 = vmatprep.subr.bf16.mxu0 0
          %1082 = vmatpush1.bf16.msra.mxu0 %v1063
          %1083 = vmatprep.subr.bf16.mxu0 0
          %1084 = vmatpush1.bf16.msra.mxu0 %v1062
          %1085 = vmatprep.subr.bf16.mxu0 0
          %1086 = vmatpush1.bf16.msra.mxu0 %v1061
          %1087 = vmatprep.subr.bf16.mxu0 0
          %1088 = vmatpush1.bf16.msra.mxu0 %v1060
          %1089 = vmatprep.subr.bf16.mxu0 0
          %1090 = vmatpush1.bf16.msra.mxu0 %v1059
          %1091 = vmatprep.subr.bf16.mxu0 0
          %1092 = vmatpush2.bf16.msra.mxu0 0
          %1093 = vmatprep.subr.bf16.mxu0 0
          %1094 = vmatpush2.bf16.msra.mxu0 0
          %1095 = vmatprep.subr.bf16.mxu0 0
          %1096 = vmatpush2.bf16.msra.mxu0 0
          %1097 = vmatprep.subr.bf16.mxu0 0
          %1098 = vmatpush2.bf16.msra.mxu0 0
          %1099 = vmatprep.subr.bf16.mxu0 0
          %1100 = vmatpush2.bf16.msra.mxu0 0
          %1101 = vmatprep.subr.bf16.mxu0 0
          %1102 = vmatpush2.bf16.msra.mxu0 0
          %1103 = vmatprep.subr.bf16.mxu0 0
          %1104 = vmatpush2.bf16.msra.mxu0 0
          %1105 = vmatprep.subr.bf16.mxu0 0
          %1106 = vmatpush2.bf16.msra.mxu0 0
          %1107 = vmatprep.mubr.bf16.mxu0 0
          %1108 = vmatmul.mubr.bf16.gmra.mxu0 %v1003
          %v1109 = vpop.f32.mrf.mxu0
          %v1110 = vadd.f32 %v1025, %v1109
          %v1111 = vpop.f32.mrf.mxu0
          %v1112 = vpop.f32.mrf.mxu0
          %v1113 = vpop.f32.mrf.mxu0
          %1114 = vdwg.mxu0
          %v1115 = vmax.f32 %v1110, 0.0
          %v1116 = vpack.c.bf16 %v1115, %v1115
          %v1117 = vld [vmem:[#allocation14] sm:$0xf]
          %v1118 = vld [vmem:[#allocation14 + $0x4] sm:$0xf]
          %v1119 = vld [vmem:[#allocation14 + $0x8] sm:$0xf]
          %v1120 = vld [vmem:[#allocation14 + $0xc] sm:$0xf]
          %v1121 = vld [vmem:[#allocation14 + $0x10] sm:$0xf]
          %v1122 = vld [vmem:[#allocation14 + $0x14] sm:$0xf]
          %v1123 = vld [vmem:[#allocation14 + $0x18] sm:$0xf]
          %v1124 = vld [vmem:[#allocation14 + $0x1c] sm:$0xf]
          %v1125 = vld [vmem:[#allocation14 + $0x20] sm:$0xf]
          %v1126 = vld [vmem:[#allocation14 + $0x24] sm:$0xf]
          %v1127 = vld [vmem:[#allocation14 + $0x28] sm:$0xf]
          %v1128 = vld [vmem:[#allocation14 + $0x2c] sm:$0xf]
          %v1129 = vld [vmem:[#allocation14 + $0x30] sm:$0xf]
          %v1130 = vld [vmem:[#allocation14 + $0x34] sm:$0xf]
          %v1131 = vld [vmem:[#allocation14 + $0x38] sm:$0xf]
          %v1132 = vld [vmem:[#allocation14 + $0x3c] sm:$0xf]
          %v1133 = vld [vmem:[%s12] sm:$0x1]
          %v1135 = vlaneseq
          %v1136 = vshrl.u32 %v1135, 7
          %v1137 = vsub.s32 0, %v1136
          %v1138 = vrot.slane %v1133, %v1137
          %v1156 = vunpack.c.l.b16 %v1117
          %v1157 = vunpack.c.l.b16 %v1118
          %v1158 = vunpack.c.l.b16 %v1119
          %v1159 = vunpack.c.l.b16 %v1120
          %v1160 = vunpack.c.l.b16 %v1121
          %v1161 = vunpack.c.l.b16 %v1122
          %v1162 = vunpack.c.l.b16 %v1123
          %v1163 = vunpack.c.l.b16 %v1124
          %v1164 = vunpack.c.l.b16 %v1125
          %v1165 = vunpack.c.l.b16 %v1126
          %v1166 = vunpack.c.l.b16 %v1127
          %v1167 = vunpack.c.l.b16 %v1128
          %v1168 = vunpack.c.l.b16 %v1129
          %v1169 = vunpack.c.l.b16 %v1130
          %v1170 = vunpack.c.l.b16 %v1131
          %v1171 = vunpack.c.l.b16 %v1132
          %v1172 = vpack.c.b16 %v1157, %v1156
          %v1173 = vpack.c.b16 %v1159, %v1158
          %v1174 = vpack.c.b16 %v1161, %v1160
          %v1175 = vpack.c.b16 %v1163, %v1162
          %v1176 = vpack.c.b16 %v1165, %v1164
          %v1177 = vpack.c.b16 %v1167, %v1166
          %v1178 = vpack.c.b16 %v1169, %v1168
          %v1179 = vpack.c.b16 %v1171, %v1170
          %1188 = vmatprep.subr.bf16.mxu0 0
          %1189 = vmatpush1.bf16.msra.mxu0 %v1179
          %1190 = vmatprep.subr.bf16.mxu0 0
          %1191 = vmatpush1.bf16.msra.mxu0 %v1178
          %1192 = vmatprep.subr.bf16.mxu0 0
          %1193 = vmatpush1.bf16.msra.mxu0 %v1177
          %1194 = vmatprep.subr.bf16.mxu0 0
          %1195 = vmatpush1.bf16.msra.mxu0 %v1176
          %1196 = vmatprep.subr.bf16.mxu0 0
          %1197 = vmatpush1.bf16.msra.mxu0 %v1175
          %1198 = vmatprep.subr.bf16.mxu0 0
          %1199 = vmatpush1.bf16.msra.mxu0 %v1174
          %1200 = vmatprep.subr.bf16.mxu0 0
          %1201 = vmatpush1.bf16.msra.mxu0 %v1173
          %1202 = vmatprep.subr.bf16.mxu0 0
          %1203 = vmatpush1.bf16.msra.mxu0 %v1172
          %1204 = vmatprep.subr.bf16.mxu0 0
          %1205 = vmatpush2.bf16.msra.mxu0 0
          %1206 = vmatprep.subr.bf16.mxu0 0
          %1207 = vmatpush2.bf16.msra.mxu0 0
          %1208 = vmatprep.subr.bf16.mxu0 0
          %1209 = vmatpush2.bf16.msra.mxu0 0
          %1210 = vmatprep.subr.bf16.mxu0 0
          %1211 = vmatpush2.bf16.msra.mxu0 0
          %1212 = vmatprep.subr.bf16.mxu0 0
          %1213 = vmatpush2.bf16.msra.mxu0 0
          %1214 = vmatprep.subr.bf16.mxu0 0
          %1215 = vmatpush2.bf16.msra.mxu0 0
          %1216 = vmatprep.subr.bf16.mxu0 0
          %1217 = vmatpush2.bf16.msra.mxu0 0
          %1218 = vmatprep.subr.bf16.mxu0 0
          %1219 = vmatpush2.bf16.msra.mxu0 0
          %1220 = vmatprep.mubr.bf16.mxu0 0
          %1221 = vmatmul.mubr.bf16.gmra.mxu0 %v1116
          %v1222 = vpop.f32.mrf.mxu0
          %v1223 = vadd.f32 %v1138, %v1222
          %v1224 = vpop.f32.mrf.mxu0
          %v1225 = vpop.f32.mrf.mxu0
          %v1226 = vpop.f32.mrf.mxu0
          %1227 = vdwg.mxu0
          %1228 = vst [vmem:[#allocation15] sm:$0xff] %v1223
        $region108: #{tpu_custom_call.1} parent=71 // pred_fallthru
          _
        // Predicated region
        $region109: #{tpu_custom_call.1} parent=71 // pred_check
          %p1229 = pneg %p322
        $region110: #{tpu_custom_call.1} parent=71 // pred_check_branch
          %1231 = sbr.rel (%p1229) target = $region112
        $region111: #{tpu_custom_call.1} parent=71 // pred_region
          %s1233 = ssub.s32 128, 128
          %1234 = vsyncadd [#allocation5], %s1233
          %s1236 = sshll.u32 [#allocation15], 4
          %s1237 = int_to_ptr.vmem [resolvable:$true] %s1236
          %1239 = dma.vmem_to_hbm [thread:$0]  %s1237, 128, %s13, [#allocation5]
        $region112: #{tpu_custom_call.1} parent=71 // pred_fallthru
          _
        // Predicated region
        $region113: #{tpu_custom_call.1} parent=71 // pred_check
          %p1240 = pneg %p322
        $region114: #{tpu_custom_call.1} parent=71 // pred_check_branch
          %1242 = sbr.rel (%p1240) target = $region116
        $region115: #{tpu_custom_call.1} parent=71 // pred_region
          %1243 = dma.done [#allocation5], 128
        $region116: #{tpu_custom_call.1} parent=71 // pred_fallthru
          _
      $region72: #{tpu_custom_call.1} parent=5 // pred_fallthru
        _
      %p1244 = scmp.le.s32.totalorder 2, %s26
      // Predicated region
      $region117: #{tpu_custom_call.1} parent=5 // pred_check
        %p1245 = pneg %p1244
      $region118: #{tpu_custom_call.1} parent=5 // pred_check_branch
        %1247 = sbr.rel (%p1245) target = $region120
      $region119: #{tpu_custom_call.1} parent=5 // pred_region
        %s1248 = ssub.s32 %s26, 2
      $region120: #{tpu_custom_call.1} parent=5 // pred_fallthru
        _
    $region6: #{tpu_custom_call.1} parent=1 // loop_footer
      %s30 = sadd.s32 1, %s26
    $region7: #{tpu_custom_call.1} parent=1 // loop_footer_branch
      %25 = sbr.rel target = $region3
    $region8: #{tpu_custom_call.1} parent=1 // loop_exit
      _
    %1249 = vsyncpa [#allocation4], 1
    %s1250 = scalar_lea.sflag [#allocation4], 1
    %1251 = vsyncpa %s1250, 1
    %1252 = vsyncpa [#allocation7], 1
    %1253 = vsyncpa [#allocation10], 1
    %1254 = vsyncpa [#allocation13], 1
    %1255 = vsyncpa [#allocation5], 1
    %s1256 = scalar_lea.sflag [#allocation5], 1
    %1257 = vsyncpa %s1256, 1

</llo_original>
